<compile_context>
chip_gen: v7x
topology: tpu7x:2x2x1
jax: 0.10.0
libtpu: 0.0.40
codegen_flags: <defaults>
</compile_context>

<pallas_src>
import functools

import jax
import jax.numpy as jnp
from jax.experimental import pallas as pl
from jax.experimental.pallas import tpu as pltpu

EPS = 1e-5

# N up to this size takes the fully-fused single-kernel path.
_FUSED_N_MAX = 1024


def _round_up(v, m):
    return ((v + m - 1) // m) * m


@functools.lru_cache(maxsize=None)
def _vmem_limit_bytes():
    # Generation-aware scoped-VMEM limit: ~3/4 of physical VMEM, capped at
    # 100 MiB (v5e/v6e: 128 MiB -> 96 MiB; v7x: 64 MiB -> 48 MiB).
    cap = 0
    try:
        cap = int(pltpu.get_tpu_info().vmem_capacity_bytes)
    except Exception:
        cap = 0
    if cap <= 0:
        return 32 * 1024 * 1024            # conservative fallback
    return int(min(cap * 3 // 4, 100 * 1024 * 1024))


def _compiler_params(grid_axes=0):
    sem = ("parallel",) * grid_axes if grid_axes else None
    return pltpu.CompilerParams(dimension_semantics=sem,
                                vmem_limit_bytes=_vmem_limit_bytes())


# ----------------------------------------------------------------------------
# Kernel bodies
# ----------------------------------------------------------------------------
def _per_head_matmul(h, w_ref, n_heads):
    """h: (rows, H*fin) activation; w_ref: resident (H, fin, fout) weights.

    Statically unrolled per-head matmuls (f32 accumulation).  Avoids the H x
    FLOP / H x weight-byte waste of a dense block-diagonal weight.
    """
    fin = w_ref.shape[1]
    outs = []
    for hd in range(n_heads):
        outs.append(jnp.dot(h[:, hd * fin:(hd + 1) * fin], w_ref[hd],
                            preferred_element_type=jnp.float32))
    return jnp.concatenate(outs, axis=-1)


def _emit_tile_stats(y, stats_ref, n_total, tile_n):
    """Per-tile (column sum, centered sum-of-squares) for exact BatchNorm.

    Only the last grid step can be a partial tile, so the row masking
    (jnp.where select -> NaN/Inf safe on padded rows) runs there only.
    """
    i = pl.program_id(0)
    last = pl.num_programs(0) - 1

    @pl.when(i < last)
    def _():
        s = jnp.sum(y, axis=0, keepdims=True)
        d = y - s * (1.0 / tile_n)
        stats_ref[0] = jnp.concatenate(
            [s, jnp.sum(d * d, axis=0, keepdims=True)], axis=0)

    @pl.when(i == last)
    def _():
        rows = jax.lax.broadcasted_iota(jnp.int32, (tile_n, 1), 0)
        valid = n_total - i * tile_n
        mask = rows < valid
        ym = jnp.where(mask, y, 0.0)
        s = jnp.sum(ym, axis=0, keepdims=True)
        d = jnp.where(mask, y - s / valid.astype(jnp.float32), 0.0)
        stats_ref[0] = jnp.concatenate(
            [s, jnp.sum(d * d, axis=0, keepdims=True)], axis=0)


def _fused_kernel(x_ref, *refs, n_layers, n_heads, compute_dtype):
    """Whole GroupMLP in one kernel (single N tile): exact in-kernel BatchNorm."""
    o_ref = refs[-1]
    w_refs = refs[:n_layers]                 # w0: (Fin, H*hid); rest: (H, fin, fout)
    b_ref = refs[n_layers]                   # final-layer bias (1, H*out)
    gb_refs = refs[n_layers + 1:-1]          # (gamma, beta) per hidden layer

    y = jnp.dot(x_ref[...].astype(compute_dtype), w_refs[0][...],
                preferred_element_type=jnp.float32)
    for l in range(1, n_layers):
        g = gb_refs[2 * (l - 1)][...]
        bt = gb_refs[2 * (l - 1) + 1][...]
        mean = jnp.mean(y, axis=0, keepdims=True)
        var = jnp.mean(jnp.square(y - mean), axis=0, keepdims=True)
        scale = jax.lax.rsqrt(var + EPS) * g
        shift = bt - mean * scale
        h = jnp.maximum(y * scale + shift, 0.0).astype(compute_dtype)
        y = _per_head_matmul(h, w_refs[l], n_heads)
    o_ref[...] = (y + b_ref[...]).astype(o_ref.dtype)


def _first_layer_kernel(x_ref, w_ref, o_ref, stats_ref, *,
                        n_total, tile_n, compute_dtype):
    # Layer 0: x shared across heads -> head-concatenated weight (Fin, H*hid).
    # In-kernel cast of x (no wrapper-side HBM pass); bias omitted (BN cancels).
    y = jnp.dot(x_ref[...].astype(compute_dtype), w_ref[...],
                preferred_element_type=jnp.float32)
    o_ref[...] = y.astype(o_ref.dtype)
    _emit_tile_stats(y, stats_ref, n_total, tile_n)


def _bn_relu_linear_kernel(y_ref, scale_ref, shift_ref, w_ref, *rest,
                           n_total, tile_n, n_heads, compute_dtype,
                           has_bias, emit_stats):
    # Folded BatchNorm (scale = rstd*gamma, shift = beta - mean*scale) + ReLU of
    # the previous layer, fused with this layer's per-head matmul.
    idx = 0
    b_ref = rest[idx] if has_bias else None
    idx += int(has_bias)
    o_ref = rest[idx]
    idx += 1
    stats_ref = rest[idx] if emit_stats else None

    h = y_ref[...].astype(jnp.float32) * scale_ref[...] + shift_ref[...]
    h = jnp.maximum(h, 0.0).astype(compute_dtype)
    y = _per_head_matmul(h, w_ref, n_heads)
    if has_bias:
        y = y + b_ref[...]
    o_ref[...] = y.astype(o_ref.dtype)
    if emit_stats:
        _emit_tile_stats(y, stats_ref, n_total, tile_n)


def _linear_kernel(x_ref, w_ref, b_ref, o_ref, *, compute_dtype):
    # n_layers == 1 (tiled): plain lane-packed linear, no norm / activation.
    o_ref[...] = (jnp.dot(x_ref[...].astype(compute_dtype), w_ref[...],
                          preferred_element_type=jnp.float32)
                  + b_ref[...]).astype(o_ref.dtype)


# ----------------------------------------------------------------------------
# pallas_call plumbing
# ----------------------------------------------------------------------------
def _row_spec(tile_n, c):
    return pl.BlockSpec((tile_n, c), lambda i: (i, 0))


def _full_spec(shape):
    # Constant block index -> block stays resident in VMEM across grid steps.
    # TODO(synk): pipeline_mode=pl.Buffered(1) would halve the resident
    # operands' VMEM footprint (negligible at these widths; revisit on v7x).
    nd = len(shape)
    return pl.BlockSpec(shape, lambda i, _nd=nd: (0,) * _nd)


def _finalize_scale_shift(pstats, n, tile_n, gamma, beta):
    """Chan-style merge of per-tile (sum, centered M2) -> folded BN vectors."""
    nt = pstats.shape[0]
    counts = jnp.full((nt, 1), float(tile_n), jnp.float32)
    counts = counts.at[nt - 1, 0].set(float(n - (nt - 1) * tile_n))
    sums = pstats[:, 0, :]                                   # (nt, C)
    m2s = pstats[:, 1, :]                                    # (nt, C)
    mean = jnp.sum(sums, axis=0, keepdims=True) / n          # (1, C)
    m2 = (jnp.sum(m2s, axis=0, keepdims=True)
          + jnp.sum(counts * jnp.square(sums / counts - mean),
                    axis=0, keepdims=True))
    scale = jax.lax.rsqrt(m2 / n + EPS) * gamma              # (1, C)
    shift = beta - mean * scale
    return scale, shift


def _tiled_forward(x, w0, w_rest, b_last, g_pk, bt_pk, n, tile_n, n_heads, cd):
    nt = pl.cdiv(n, tile_n)
    n_layers = 1 + len(w_rest)
    in_feats = x.shape[1]
    params = _compiler_params(1)

    if n_layers == 1:
        c = w0.shape[1]
        return pl.pallas_call(
            functools.partial(_linear_kernel, compute_dtype=cd),
            grid=(nt,),
            in_specs=[_row_spec(tile_n, in_feats), _full_spec(w0.shape),
                      _full_spec(b_last.shape)],
            out_specs=_row_spec(tile_n, c),
            out_shape=jax.ShapeDtypeStruct((n, c), jnp.float32),
            compiler_params=params,
        )(x, w0, b_last)

    # Layer 0: lane-packed matmul + per-tile batch statistics.
    c0 = w0.shape[1]
    y, pstats = pl.pallas_call(
        functools.partial(_first_layer_kernel, n_total=n, tile_n=tile_n,
                          compute_dtype=cd),
        grid=(nt,),
        in_specs=[_row_spec(tile_n, in_feats), _full_spec(w0.shape)],
        out_specs=(_row_spec(tile_n, c0),
                   pl.BlockSpec((1, 2, c0), lambda i: (i, 0, 0))),
        out_shape=(jax.ShapeDtypeStruct((n, c0), cd),
                   jax.ShapeDtypeStruct((nt, 2, c0), jnp.float32)),
        compiler_params=params,
    )(x, w0)

    out = None
    for l in range(1, n_layers):
        is_last = l == n_layers - 1
        # Tiny (nt, 2, C) reduction to folded scale/shift runs in XLA.
        scale, shift = _finalize_scale_shift(pstats, n, tile_n,
                                             g_pk[l - 1], bt_pk[l - 1])
        w = w_rest[l - 1]                                    # (H, fin, fout)
        cin = y.shape[1]
        cout = n_heads * w.shape[2]
        in_specs = [_row_spec(tile_n, cin), _full_spec(scale.shape),
                    _full_spec(shift.shape), _full_spec(w.shape)]
        args = [y, scale, shift, w]
        if is_last:
            in_specs.append(_full_spec(b_last.shape))
            args.append(b_last)
            out_specs = _row_spec(tile_n, cout)
            out_shape = jax.ShapeDtypeStruct((n, cout), jnp.float32)
        else:
            out_specs = (_row_spec(tile_n, cout),
                         pl.BlockSpec((1, 2, cout), lambda i: (i, 0, 0)))
            out_shape = (jax.ShapeDtypeStruct((n, cout), cd),
                         jax.ShapeDtypeStruct((nt, 2, cout), jnp.float32))
        res = pl.pallas_call(
            functools.partial(_bn_relu_linear_kernel, n_total=n, tile_n=tile_n,
                              n_heads=n_heads, compute_dtype=cd,
                              has_bias=is_last, emit_stats=not is_last),
            grid=(nt,),
            in_specs=in_specs,
            out_specs=out_specs,
            out_shape=out_shape,
            compiler_params=params,
        )(*args)
        if is_last:
            out = res
        else:
            y, pstats = res
    return out


# ----------------------------------------------------------------------------
# Forward pass
# ----------------------------------------------------------------------------
@functools.partial(jax.jit,
                   static_argnames=("tile_n", "compute_dtype", "flat_output"))
def group_mlp_forward(x, weights, biases, gammas, betas, *,
                      tile_n=None, compute_dtype=jnp.bfloat16,
                      flat_output=False):
    """x: (N, in_feats) -> (N, n_heads, out_feats); matches PyTorch GroupMLP
    (dropout=input_drop=0, residual=False, normalization='batch', train mode).

    compute_dtype controls MXU inputs and inter-layer activation storage
    (f32 accumulation and f32 BatchNorm math always); bf16 (default) halves
    HBM traffic for this memory-bound op.
    """
    n, in_feats = x.shape
    n_layers = len(weights)
    n_heads = weights[0].shape[0]
    out_feats = weights[-1].shape[-1]
    cd = compute_dtype

    # ---- head packing (weights cast once, in the wrapper) ------------------
    w0 = jnp.transpose(weights[0], (1, 0, 2)).reshape(in_feats, -1).astype(cd)
    w_rest = [w.astype(cd) for w in weights[1:]]             # per-head weights
    b_last = biases[-1].reshape(1, -1).astype(jnp.float32)   # final-layer bias
    g_pk = [g.reshape(1, -1).astype(jnp.float32) for g in gammas]
    bt_pk = [b.reshape(1, -1).astype(jnp.float32) for b in betas]
    # Hidden-layer linear biases are dropped: batch-stat BN cancels them exactly.

    # ---- path selection -----------------------------------------------------
    if tile_n is None:
        fused = n <= _FUSED_N_MAX
        if not fused:
            # Guarantee nt >= 2 (v7x megacore) while favoring large tiles;
            # allow 2048-row tiles when the VMEM budget is generous (v5e/v6e).
            cap = 2048 if _vmem_limit_bytes() >= 64 * 1024 * 1024 else 1024
            tile_n = min(cap, _round_up(pl.cdiv(n, 2), 16))
    else:
        tile_n = _round_up(int(tile_n), 16)
        fused = tile_n >= n

    if fused:
        # Single kernel: all layers, exact in-kernel BatchNorm, weights resident.
        # TODO(synk): nt==1 leaves one v7x TensorCore idle; a core_map row split
        #             with a cross-core stats exchange would engage both.
        args = [x, w0] + w_rest + [b_last]
        for g, bt in zip(g_pk, bt_pk):
            args += [g, bt]
        out = pl.pallas_call(
            functools.partial(_fused_kernel, n_layers=n_layers,
                              n_heads=n_heads, compute_dtype=cd),
            out_shape=jax.ShapeDtypeStruct((n, n_heads * out_feats),
                                           jnp.float32),
            compiler_params=_compiler_params(0),
        )(*args)
    else:
        out = _tiled_forward(x, w0, w_rest, b_last, g_pk, bt_pk,
                             n, tile_n, n_heads, cd)

    if flat_output:
        return out            # (N, H*out_feats): lane-dense, no relayout copy
    # Module-shaped output; last dim < 128 lanes, so XLA may relayout here.
    return out.reshape(n, n_heads, out_feats)


# ----------------------------------------------------------------------------
# Pure-JAX reference (mirrors the PyTorch forward)
# ----------------------------------------------------------------------------
def group_mlp_reference(x, weights, biases, gammas, betas):
    hp = jax.lax.Precision.HIGHEST
    xh = x[None, :, :]                                       # (1, N, Fin)
    n_layers = len(weights)
    for i in range(n_layers):
        y = jnp.matmul(xh, weights[i], precision=hp) + biases[i]   # (H, N, C)
        if i < n_layers - 1:
            mean = jnp.mean(y, axis=1, keepdims=True)
            var = jnp.mean(jnp.square(y - mean), axis=1, keepdims=True)
            y = (y - mean) * jax.lax.rsqrt(var + EPS)
            y = y * gammas[i] + betas[i]
            y = jnp.maximum(y, 0.0)
        xh = y
    return jnp.transpose(xh, (1, 0, 2))                      # (N, H, C_out)


# ----------------------------------------------------------------------------
# Deterministic parameter construction
# ----------------------------------------------------------------------------
def make_params(key, in_feats, hidden, out_feats, n_heads, n_layers):
    dims = [in_feats] + [hidden] * (n_layers - 1) + [out_feats]
    weights, biases, gammas, betas = [], [], [], []
    gain = jnp.sqrt(2.0)                     # nn.init.calculate_gain('relu')
    for l in range(n_layers):
        fin, fout = dims[l], dims[l + 1]
        key, kw, kb, kg, kbt = jax.random.split(key, 5)
        bound = gain * jnp.sqrt(6.0 / (fin + fout))          # xavier_uniform
        weights.append(jax.random.uniform(kw, (n_heads, fin, fout),
                                          jnp.float32, -bound, bound))
        biases.append(0.1 * jax.random.normal(kb, (n_heads, 1, fout),
                                              jnp.float32))
        if l < n_layers - 1:
            gammas.append(1.0 + 0.05 * jax.random.normal(
                kg, (n_heads, 1, fout), jnp.float32))
            betas.append(0.05 * jax.random.normal(
                kbt, (n_heads, 1, fout), jnp.float32))
    return weights, biases, gammas, betas


if __name__ == "__main__":
    # Small shapes consistent with GroupMLP: in=32, hidden=32, out=16, 4 heads,
    # 3 layers.  Packed lane widths: H*hidden = 128, H*out = 64.
    N, in_feats, hidden, out_feats, n_heads, n_layers = 16, 32, 32, 16, 4, 3

    key = jax.random.PRNGKey(0)
    key, kx = jax.random.split(key)
    x = jax.random.normal(kx, (N, in_feats), jnp.float32)
    weights, biases, gammas, betas = make_params(
        key, in_feats, hidden, out_feats, n_heads, n_layers)
    ref = group_mlp_reference(x, weights, biases, gammas, betas)

    # Fused single-kernel path, f32 numerics (tolerance leaves headroom for
    # MXU f32 pass-count differences while still catching head/BN mix-ups).
    out_f32 = jax.block_until_ready(
        group_mlp_forward(x, weights, biases, gammas, betas,
                          compute_dtype=jnp.float32))
    assert out_f32.shape == (N, n_heads, out_feats), out_f32.shape
    assert jnp.allclose(out_f32, ref, atol=1e-2, rtol=1e-2), "fused f32 mismatch"

    # Fused path with the default bf16 MXU inputs / bf16 activation storage.
    out_bf16 = jax.block_until_ready(
        group_mlp_forward(x, weights, biases, gammas, betas))
    assert jnp.allclose(out_bf16, ref, atol=2.5e-1, rtol=5e-2), \
        "fused bf16 mismatch"

    # Tiled path: nt = 3 with a partial edge tile -> exercises the row-tiled
    # grid, edge-only masking, and the two-pass (Chan-merge) BatchNorm.
    N2 = 300
    key, kx2 = jax.random.split(key)
    x2 = jax.random.normal(kx2, (N2, in_feats), jnp.float32)
    ref2 = group_mlp_reference(x2, weights, biases, gammas, betas)
    out2 = jax.block_until_ready(
        group_mlp_forward(x2, weights, biases, gammas, betas,
                          tile_n=128, compute_dtype=jnp.float32))
    assert out2.shape == (N2, n_heads, out_feats), out2.shape
    assert jnp.allclose(out2, ref2, atol=1e-2, rtol=1e-2), "tiled f32 mismatch"

    out2_bf16 = jax.block_until_ready(
        group_mlp_forward(x2, weights, biases, gammas, betas, tile_n=128))
    assert jnp.allclose(out2_bf16, ref2, atol=2.5e-1, rtol=5e-2), \
        "tiled bf16 mismatch"

    # n_layers == 1 (single MultiHeadLinear, bias kept, no norm/activation).
    w1, b1, g1, bt1 = make_params(jax.random.PRNGKey(1), in_feats, hidden,
                                  out_feats, n_heads, 1)
    ref1 = group_mlp_reference(x, w1, b1, g1, bt1)
    out1 = jax.block_until_ready(
        group_mlp_forward(x, w1, b1, g1, bt1, compute_dtype=jnp.float32))
    assert out1.shape == (N, n_heads, out_feats), out1.shape
    assert jnp.allclose(out1, ref1, atol=1e-2, rtol=1e-2), "1-layer mismatch"

    print("KERNEL_OK")
</pallas_src>

<mosaic_0001>
module attributes {stable_mosaic.version = 11 : i64} {
  func.func @_fused_kernel(%arg0: memref<16x32xf32, #tpu.memory_space<vmem>>, %arg1: memref<32x128xf32, #tpu.memory_space<vmem>>, %arg2: memref<4x32x32xf32, #tpu.memory_space<vmem>>, %arg3: memref<4x32x16xf32, #tpu.memory_space<vmem>>, %arg4: memref<1x64xf32, #tpu.memory_space<vmem>>, %arg5: memref<1x128xf32, #tpu.memory_space<vmem>>, %arg6: memref<1x128xf32, #tpu.memory_space<vmem>>, %arg7: memref<1x128xf32, #tpu.memory_space<vmem>>, %arg8: memref<1x128xf32, #tpu.memory_space<vmem>>, %arg9: memref<16x64xf32, #tpu.memory_space<vmem>>) attributes {dimension_semantics = [], scalar_prefetch = 0 : i64, scratch_operands = 0 : i64, tpu.core_type = #tpu.core_type<tc>} {
    %c0 = arith.constant 0 : index
    %c0_0 = arith.constant 0 : index
    %0 = vector.load %arg0[%c0, %c0_0] : memref<16x32xf32, #tpu.memory_space<vmem>>, vector<16x32xf32>
    %c0_1 = arith.constant 0 : index
    %c0_2 = arith.constant 0 : index
    %1 = vector.load %arg1[%c0_1, %c0_2] : memref<32x128xf32, #tpu.memory_space<vmem>>, vector<32x128xf32>
    %cst = arith.constant dense<0.000000e+00> : vector<16x128xf32>
    %2 = tpu.matmul %0, %1, %cst {dimension_numbers = #tpu.dot_dimension_numbers<[1], [0], [0], [1], [0, 0, 1, 1], [], []>} : vector<16x32xf32>, vector<32x128xf32>, vector<16x128xf32> -> vector<16x128xf32>
    %c0_3 = arith.constant 0 : index
    %c0_4 = arith.constant 0 : index
    %3 = vector.load %arg5[%c0_3, %c0_4] : memref<1x128xf32, #tpu.memory_space<vmem>>, vector<1x128xf32>
    %c0_5 = arith.constant 0 : index
    %c0_6 = arith.constant 0 : index
    %4 = vector.load %arg6[%c0_5, %c0_6] : memref<1x128xf32, #tpu.memory_space<vmem>>, vector<1x128xf32>
    %cst_7 = arith.constant dense<0.000000e+00> : vector<128xf32>
    %5 = vector.multi_reduction <add>, %2, %cst_7 [0] : vector<16x128xf32> to vector<128xf32>
    %6 = vector.shape_cast %5 : vector<128xf32> to vector<1x128xf32>
    %cst_8 = arith.constant 1.600000e+01 : f32
    %7 = vector.broadcast %cst_8 : f32 to vector<1x128xf32>
    %8 = arith.divf %6, %7 : vector<1x128xf32>
    %9 = vector.broadcast %8 : vector<1x128xf32> to vector<16x128xf32>
    %10 = arith.subf %2, %9 : vector<16x128xf32>
    %11 = arith.mulf %10, %10 : vector<16x128xf32>
    %cst_9 = arith.constant dense<0.000000e+00> : vector<128xf32>
    %12 = vector.multi_reduction <add>, %11, %cst_9 [0] : vector<16x128xf32> to vector<128xf32>
    %13 = vector.shape_cast %12 : vector<128xf32> to vector<1x128xf32>
    %cst_10 = arith.constant 1.600000e+01 : f32
    %14 = vector.broadcast %cst_10 : f32 to vector<1x128xf32>
    %15 = arith.divf %13, %14 : vector<1x128xf32>
    %cst_11 = arith.constant 9.99999974E-6 : f32
    %16 = vector.broadcast %cst_11 : f32 to vector<1x128xf32>
    %17 = arith.addf %15, %16 : vector<1x128xf32>
    %18 = math.rsqrt %17 : vector<1x128xf32>
    %19 = arith.mulf %18, %3 : vector<1x128xf32>
    %20 = arith.mulf %8, %19 : vector<1x128xf32>
    %21 = arith.subf %4, %20 : vector<1x128xf32>
    %22 = vector.broadcast %19 : vector<1x128xf32> to vector<16x128xf32>
    %23 = arith.mulf %2, %22 : vector<16x128xf32>
    %24 = vector.broadcast %21 : vector<1x128xf32> to vector<16x128xf32>
    %25 = arith.addf %23, %24 : vector<16x128xf32>
    %cst_12 = arith.constant 0.000000e+00 : f32
    %26 = vector.broadcast %cst_12 : f32 to vector<16x128xf32>
    %27 = arith.maximumf %25, %26 : vector<16x128xf32>
    %28 = vector.extract_strided_slice %27 {offsets = [0, 0], sizes = [16, 32], strides = [1, 1]} : vector<16x128xf32> to vector<16x32xf32>
    %c0_13 = arith.constant 0 : index
    %c0_14 = arith.constant 0 : index
    %c0_15 = arith.constant 0 : index
    %29 = vector.load %arg2[%c0_13, %c0_14, %c0_15] : memref<4x32x32xf32, #tpu.memory_space<vmem>>, vector<1x32x32xf32>
    %30 = vector.shape_cast %29 : vector<1x32x32xf32> to vector<32x32xf32>
    %cst_16 = arith.constant dense<0.000000e+00> : vector<16x32xf32>
    %31 = tpu.matmul %28, %30, %cst_16 {dimension_numbers = #tpu.dot_dimension_numbers<[1], [0], [0], [1], [0, 0, 1, 1], [], []>} : vector<16x32xf32>, vector<32x32xf32>, vector<16x32xf32> -> vector<16x32xf32>
    %32 = vector.extract_strided_slice %27 {offsets = [0, 32], sizes = [16, 32], strides = [1, 1]} : vector<16x128xf32> to vector<16x32xf32>
    %c1 = arith.constant 1 : index
    %c0_17 = arith.constant 0 : index
    %c0_18 = arith.constant 0 : index
    %33 = vector.load %arg2[%c1, %c0_17, %c0_18] : memref<4x32x32xf32, #tpu.memory_space<vmem>>, vector<1x32x32xf32>
    %34 = vector.shape_cast %33 : vector<1x32x32xf32> to vector<32x32xf32>
    %cst_19 = arith.constant dense<0.000000e+00> : vector<16x32xf32>
    %35 = tpu.matmul %32, %34, %cst_19 {dimension_numbers = #tpu.dot_dimension_numbers<[1], [0], [0], [1], [0, 0, 1, 1], [], []>} : vector<16x32xf32>, vector<32x32xf32>, vector<16x32xf32> -> vector<16x32xf32>
    %36 = vector.extract_strided_slice %27 {offsets = [0, 64], sizes = [16, 32], strides = [1, 1]} : vector<16x128xf32> to vector<16x32xf32>
    %c2 = arith.constant 2 : index
    %c0_20 = arith.constant 0 : index
    %c0_21 = arith.constant 0 : index
    %37 = vector.load %arg2[%c2, %c0_20, %c0_21] : memref<4x32x32xf32, #tpu.memory_space<vmem>>, vector<1x32x32xf32>
    %38 = vector.shape_cast %37 : vector<1x32x32xf32> to vector<32x32xf32>
    %cst_22 = arith.constant dense<0.000000e+00> : vector<16x32xf32>
    %39 = tpu.matmul %36, %38, %cst_22 {dimension_numbers = #tpu.dot_dimension_numbers<[1], [0], [0], [1], [0, 0, 1, 1], [], []>} : vector<16x32xf32>, vector<32x32xf32>, vector<16x32xf32> -> vector<16x32xf32>
    %40 = vector.extract_strided_slice %27 {offsets = [0, 96], sizes = [16, 32], strides = [1, 1]} : vector<16x128xf32> to vector<16x32xf32>
    %c3 = arith.constant 3 : index
    %c0_23 = arith.constant 0 : index
    %c0_24 = arith.constant 0 : index
    %41 = vector.load %arg2[%c3, %c0_23, %c0_24] : memref<4x32x32xf32, #tpu.memory_space<vmem>>, vector<1x32x32xf32>
    %42 = vector.shape_cast %41 : vector<1x32x32xf32> to vector<32x32xf32>
    %cst_25 = arith.constant dense<0.000000e+00> : vector<16x32xf32>
    %43 = tpu.matmul %40, %42, %cst_25 {dimension_numbers = #tpu.dot_dimension_numbers<[1], [0], [0], [1], [0, 0, 1, 1], [], []>} : vector<16x32xf32>, vector<32x32xf32>, vector<16x32xf32> -> vector<16x32xf32>
    %44 = tpu.concatenate %31, %35, %39, %43 in 1 : vector<16x32xf32>, vector<16x32xf32>, vector<16x32xf32>, vector<16x32xf32> -> vector<16x128xf32>
    %c0_26 = arith.constant 0 : index
    %c0_27 = arith.constant 0 : index
    %45 = vector.load %arg7[%c0_26, %c0_27] : memref<1x128xf32, #tpu.memory_space<vmem>>, vector<1x128xf32>
    %c0_28 = arith.constant 0 : index
    %c0_29 = arith.constant 0 : index
    %46 = vector.load %arg8[%c0_28, %c0_29] : memref<1x128xf32, #tpu.memory_space<vmem>>, vector<1x128xf32>
    %cst_30 = arith.constant dense<0.000000e+00> : vector<128xf32>
    %47 = vector.multi_reduction <add>, %44, %cst_30 [0] : vector<16x128xf32> to vector<128xf32>
    %48 = vector.shape_cast %47 : vector<128xf32> to vector<1x128xf32>
    %cst_31 = arith.constant 1.600000e+01 : f32
    %49 = vector.broadcast %cst_31 : f32 to vector<1x128xf32>
    %50 = arith.divf %48, %49 : vector<1x128xf32>
    %51 = vector.broadcast %50 : vector<1x128xf32> to vector<16x128xf32>
    %52 = arith.subf %44, %51 : vector<16x128xf32>
    %53 = arith.mulf %52, %52 : vector<16x128xf32>
    %cst_32 = arith.constant dense<0.000000e+00> : vector<128xf32>
    %54 = vector.multi_reduction <add>, %53, %cst_32 [0] : vector<16x128xf32> to vector<128xf32>
    %55 = vector.shape_cast %54 : vector<128xf32> to vector<1x128xf32>
    %cst_33 = arith.constant 1.600000e+01 : f32
    %56 = vector.broadcast %cst_33 : f32 to vector<1x128xf32>
    %57 = arith.divf %55, %56 : vector<1x128xf32>
    %cst_34 = arith.constant 9.99999974E-6 : f32
    %58 = vector.broadcast %cst_34 : f32 to vector<1x128xf32>
    %59 = arith.addf %57, %58 : vector<1x128xf32>
    %60 = math.rsqrt %59 : vector<1x128xf32>
    %61 = arith.mulf %60, %45 : vector<1x128xf32>
    %62 = arith.mulf %50, %61 : vector<1x128xf32>
    %63 = arith.subf %46, %62 : vector<1x128xf32>
    %64 = vector.broadcast %61 : vector<1x128xf32> to vector<16x128xf32>
    %65 = arith.mulf %44, %64 : vector<16x128xf32>
    %66 = vector.broadcast %63 : vector<1x128xf32> to vector<16x128xf32>
    %67 = arith.addf %65, %66 : vector<16x128xf32>
    %cst_35 = arith.constant 0.000000e+00 : f32
    %68 = vector.broadcast %cst_35 : f32 to vector<16x128xf32>
    %69 = arith.maximumf %67, %68 : vector<16x128xf32>
    %70 = vector.extract_strided_slice %69 {offsets = [0, 0], sizes = [16, 32], strides = [1, 1]} : vector<16x128xf32> to vector<16x32xf32>
    %c0_36 = arith.constant 0 : index
    %c0_37 = arith.constant 0 : index
    %c0_38 = arith.constant 0 : index
    %71 = vector.load %arg3[%c0_36, %c0_37, %c0_38] : memref<4x32x16xf32, #tpu.memory_space<vmem>>, vector<1x32x16xf32>
    %72 = vector.shape_cast %71 : vector<1x32x16xf32> to vector<32x16xf32>
    %cst_39 = arith.constant dense<0.000000e+00> : vector<16x16xf32>
    %73 = tpu.matmul %70, %72, %cst_39 {dimension_numbers = #tpu.dot_dimension_numbers<[1], [0], [0], [1], [0, 0, 1, 1], [], []>} : vector<16x32xf32>, vector<32x16xf32>, vector<16x16xf32> -> vector<16x16xf32>
    %74 = vector.extract_strided_slice %69 {offsets = [0, 32], sizes = [16, 32], strides = [1, 1]} : vector<16x128xf32> to vector<16x32xf32>
    %c1_40 = arith.constant 1 : index
    %c0_41 = arith.constant 0 : index
    %c0_42 = arith.constant 0 : index
    %75 = vector.load %arg3[%c1_40, %c0_41, %c0_42] : memref<4x32x16xf32, #tpu.memory_space<vmem>>, vector<1x32x16xf32>
    %76 = vector.shape_cast %75 : vector<1x32x16xf32> to vector<32x16xf32>
    %cst_43 = arith.constant dense<0.000000e+00> : vector<16x16xf32>
    %77 = tpu.matmul %74, %76, %cst_43 {dimension_numbers = #tpu.dot_dimension_numbers<[1], [0], [0], [1], [0, 0, 1, 1], [], []>} : vector<16x32xf32>, vector<32x16xf32>, vector<16x16xf32> -> vector<16x16xf32>
    %78 = vector.extract_strided_slice %69 {offsets = [0, 64], sizes = [16, 32], strides = [1, 1]} : vector<16x128xf32> to vector<16x32xf32>
    %c2_44 = arith.constant 2 : index
    %c0_45 = arith.constant 0 : index
    %c0_46 = arith.constant 0 : index
    %79 = vector.load %arg3[%c2_44, %c0_45, %c0_46] : memref<4x32x16xf32, #tpu.memory_space<vmem>>, vector<1x32x16xf32>
    %80 = vector.shape_cast %79 : vector<1x32x16xf32> to vector<32x16xf32>
    %cst_47 = arith.constant dense<0.000000e+00> : vector<16x16xf32>
    %81 = tpu.matmul %78, %80, %cst_47 {dimension_numbers = #tpu.dot_dimension_numbers<[1], [0], [0], [1], [0, 0, 1, 1], [], []>} : vector<16x32xf32>, vector<32x16xf32>, vector<16x16xf32> -> vector<16x16xf32>
    %82 = vector.extract_strided_slice %69 {offsets = [0, 96], sizes = [16, 32], strides = [1, 1]} : vector<16x128xf32> to vector<16x32xf32>
    %c3_48 = arith.constant 3 : index
    %c0_49 = arith.constant 0 : index
    %c0_50 = arith.constant 0 : index
    %83 = vector.load %arg3[%c3_48, %c0_49, %c0_50] : memref<4x32x16xf32, #tpu.memory_space<vmem>>, vector<1x32x16xf32>
    %84 = vector.shape_cast %83 : vector<1x32x16xf32> to vector<32x16xf32>
    %cst_51 = arith.constant dense<0.000000e+00> : vector<16x16xf32>
    %85 = tpu.matmul %82, %84, %cst_51 {dimension_numbers = #tpu.dot_dimension_numbers<[1], [0], [0], [1], [0, 0, 1, 1], [], []>} : vector<16x32xf32>, vector<32x16xf32>, vector<16x16xf32> -> vector<16x16xf32>
    %86 = tpu.concatenate %73, %77, %81, %85 in 1 : vector<16x16xf32>, vector<16x16xf32>, vector<16x16xf32>, vector<16x16xf32> -> vector<16x64xf32>
    %c0_52 = arith.constant 0 : index
    %c0_53 = arith.constant 0 : index
    %87 = vector.load %arg4[%c0_52, %c0_53] : memref<1x64xf32, #tpu.memory_space<vmem>>, vector<1x64xf32>
    %88 = vector.broadcast %87 : vector<1x64xf32> to vector<16x64xf32>
    %89 = arith.addf %86, %88 : vector<16x64xf32>
    %c0_54 = arith.constant 0 : index
    %c0_55 = arith.constant 0 : index
    %90 = vector.load %arg9[%c0_54, %c0_55] : memref<16x64xf32, #tpu.memory_space<vmem>>, vector<16x64xf32>
    tpu.vector_store %arg9[%c0_54, %c0_55], %89 {strides = array<i32>} : memref<16x64xf32, #tpu.memory_space<vmem>>, vector<16x64xf32>,
    return
  }
}

</mosaic_0001>

<llo_original>
// kernel: group_mlp_forward.1
$region0: #{group_mlp_forward.1}
  #allocation0 [shape = 'u32[]', space=smem, size = 0x4, offset = 0x4, fixed_abs, tag = 'smem constant byte address 0x4 - core index']
  #allocation1 [shape = 'u32[144,128]{1,0:T(1,128)}', space=vmem, size = 0x12000, scoped, tag = 'internal scratch']
  %s0 = inlined_call_operand.vmem [shape: f32[16,32], index: 0, kind: input, shape index: {}]
  %s1 = inlined_call_operand.vmem [shape: f32[32,128], index: 1, kind: input, shape index: {}]
  %s2 = inlined_call_operand.vmem [shape: f32[4,32,32], index: 2, kind: input, shape index: {}]
  %s3 = inlined_call_operand.vmem [shape: f32[4,32,16], index: 3, kind: input, shape index: {}]
  %s4 = inlined_call_operand.vmem [shape: f32[1,64], index: 4, kind: input, shape index: {}]
  %s5 = inlined_call_operand.vmem [shape: f32[1,128], index: 5, kind: input, shape index: {}]
  %s6 = inlined_call_operand.vmem [shape: f32[1,128], index: 6, kind: input, shape index: {}]
  %s7 = inlined_call_operand.vmem [shape: f32[1,128], index: 7, kind: input, shape index: {}]
  %s8 = inlined_call_operand.vmem [shape: f32[1,128], index: 8, kind: input, shape index: {}]
  %s9 = inlined_call_operand.vmem [shape: f32[16,64], index: 9, kind: output, shape index: {}]
  %s10 = sld [smem:[#allocation0]]
  $region46: #{group_mlp_forward.1} parent=0
    _
  %s12 = ssub.s32 1, %s10
  %s13 = scalar_select 0, %s12, %s10
  // Predicated region
  $region2: #{group_mlp_forward.1} parent=0 // pred_check
    _
  $region3: #{group_mlp_forward.1} parent=0 // pred_check_branch
    %15 = sbr.rel (0) target = $region5
  $region4: #{group_mlp_forward.1} parent=0 // pred_region
    _
  $region5: #{group_mlp_forward.1} parent=0 // pred_fallthru
    _
  // Predicated region
  $region6: #{group_mlp_forward.1} parent=0 // pred_check
    _
  $region7: #{group_mlp_forward.1} parent=0 // pred_check_branch
    %17 = sbr.rel (0) target = $region9
  $region8: #{group_mlp_forward.1} parent=0 // pred_region
    _
  $region9: #{group_mlp_forward.1} parent=0 // pred_fallthru
    _
  // Predicated region
  $region10: #{group_mlp_forward.1} parent=0 // pred_check
    _
  $region11: #{group_mlp_forward.1} parent=0 // pred_check_branch
    %19 = sbr.rel (0) target = $region13
  $region12: #{group_mlp_forward.1} parent=0 // pred_region
    _
  $region13: #{group_mlp_forward.1} parent=0 // pred_fallthru
    _
  // Predicated region
  $region14: #{group_mlp_forward.1} parent=0 // pred_check
    _
  $region15: #{group_mlp_forward.1} parent=0 // pred_check_branch
    %21 = sbr.rel (0) target = $region17
  $region16: #{group_mlp_forward.1} parent=0 // pred_region
    _
  $region17: #{group_mlp_forward.1} parent=0 // pred_fallthru
    _
  // Predicated region
  $region18: #{group_mlp_forward.1} parent=0 // pred_check
    _
  $region19: #{group_mlp_forward.1} parent=0 // pred_check_branch
    %23 = sbr.rel (0) target = $region21
  $region20: #{group_mlp_forward.1} parent=0 // pred_region
    _
  $region21: #{group_mlp_forward.1} parent=0 // pred_fallthru
    _
  // Predicated region
  $region22: #{group_mlp_forward.1} parent=0 // pred_check
    _
  $region23: #{group_mlp_forward.1} parent=0 // pred_check_branch
    %25 = sbr.rel (0) target = $region25
  $region24: #{group_mlp_forward.1} parent=0 // pred_region
    _
  $region25: #{group_mlp_forward.1} parent=0 // pred_fallthru
    _
  // Predicated region
  $region26: #{group_mlp_forward.1} parent=0 // pred_check
    _
  $region27: #{group_mlp_forward.1} parent=0 // pred_check_branch
    %27 = sbr.rel (0) target = $region29
  $region28: #{group_mlp_forward.1} parent=0 // pred_region
    _
  $region29: #{group_mlp_forward.1} parent=0 // pred_fallthru
    _
  // Predicated region
  $region30: #{group_mlp_forward.1} parent=0 // pred_check
    _
  $region31: #{group_mlp_forward.1} parent=0 // pred_check_branch
    %29 = sbr.rel (0) target = $region33
  $region32: #{group_mlp_forward.1} parent=0 // pred_region
    _
  $region33: #{group_mlp_forward.1} parent=0 // pred_fallthru
    _
  // Predicated region
  $region34: #{group_mlp_forward.1} parent=0 // pred_check
    _
  $region35: #{group_mlp_forward.1} parent=0 // pred_check_branch
    %31 = sbr.rel (0) target = $region37
  $region36: #{group_mlp_forward.1} parent=0 // pred_region
    _
  $region37: #{group_mlp_forward.1} parent=0 // pred_fallthru
    _
  %v32 = vld [vmem:[%s0] sm:$0xff]
  %v33 = vld [vmem:[%s0 + $0x8] sm:$0xff]
  %v34 = vld [vmem:[%s1] sm:$0xff]
  %v35 = vld [vmem:[%s1 + $0x8] sm:$0xff]
  %v36 = vld [vmem:[%s1 + $0x10] sm:$0xff]
  %v37 = vld [vmem:[%s1 + $0x18] sm:$0xff]
  %vm38 = vcmask 261120
  %v40 = vsel %vm38, %v32, 0
  %v43 = vsel %vm38, %v33, 0
  %45 = vmatprep.subr.mxu0 0.0
  %46 = vmatpush1.msra.mxu0 %v34
  %47 = vmatprep.subr.mxu0 0.0
  %48 = vmatpush1.msra.mxu0 %v35
  %49 = vmatprep.subr.mxu0 0.0
  %50 = vmatpush1.msra.mxu0 %v36
  %51 = vmatprep.subr.mxu0 0.0
  %52 = vmatpush1.msra.mxu0 %v37
  %53 = vmatprep.subr.mxu0 0.0
  %54 = vmatpush1.msra.mxu0 0.0
  %55 = vmatprep.subr.mxu0 0.0
  %56 = vmatpush1.msra.mxu0 0.0
  %57 = vmatprep.subr.mxu0 0.0
  %58 = vmatpush1.msra.mxu0 0.0
  %59 = vmatprep.subr.mxu0 0.0
  %60 = vmatpush1.msra.mxu0 0.0
  %61 = vmatprep.subr.mxu0 0.0
  %62 = vmatpush1.msra.mxu0 0.0
  %63 = vmatprep.subr.mxu0 0.0
  %64 = vmatpush1.msra.mxu0 0.0
  %65 = vmatprep.subr.mxu0 0.0
  %66 = vmatpush1.msra.mxu0 0.0
  %67 = vmatprep.subr.mxu0 0.0
  %68 = vmatpush1.msra.mxu0 0.0
  %69 = vmatprep.subr.mxu0 0.0
  %70 = vmatpush1.msra.mxu0 0.0
  %71 = vmatprep.subr.mxu0 0.0
  %72 = vmatpush1.msra.mxu0 0.0
  %73 = vmatprep.subr.mxu0 0.0
  %74 = vmatpush1.msra.mxu0 0.0
  %75 = vmatprep.subr.mxu0 0.0
  %76 = vmatpush1.msra.mxu0 0.0
  %77 = vmatprep.subr.mxu0 0.0
  %78 = vmatpush1.msra.mxu0 0.0
  %79 = vmatprep.subr.mxu0 0.0
  %80 = vmatpush1.msra.mxu0 0.0
  %81 = vmatprep.subr.mxu0 0.0
  %82 = vmatpush1.msra.mxu0 0.0
  %83 = vmatprep.subr.mxu0 0.0
  %84 = vmatpush1.msra.mxu0 0.0
  %85 = vmatprep.subr.mxu0 0.0
  %86 = vmatpush1.msra.mxu0 0.0
  %87 = vmatprep.subr.mxu0 0.0
  %88 = vmatpush1.msra.mxu0 0.0
  %89 = vmatprep.subr.mxu0 0.0
  %90 = vmatpush1.msra.mxu0 0.0
  %91 = vmatprep.subr.mxu0 0.0
  %92 = vmatpush1.msra.mxu0 0.0
  %93 = vmatprep.subr.mxu0 0.0
  %94 = vmatpush1.msra.mxu0 0.0
  %95 = vmatprep.subr.mxu0 0.0
  %96 = vmatpush1.msra.mxu0 0.0
  %97 = vmatprep.subr.mxu0 0.0
  %98 = vmatpush1.msra.mxu0 0.0
  %99 = vmatprep.subr.mxu0 0.0
  %100 = vmatpush1.msra.mxu0 0.0
  %101 = vmatprep.subr.mxu0 0.0
  %102 = vmatpush1.msra.mxu0 0.0
  %103 = vmatprep.subr.mxu0 0.0
  %104 = vmatpush1.msra.mxu0 0.0
  %105 = vmatprep.subr.mxu0 0.0
  %106 = vmatpush1.msra.mxu0 0.0
  %107 = vmatprep.subr.mxu0 0.0
  %108 = vmatpush1.msra.mxu0 0.0
  %109 = vmatprep.mubr.f32.mxu0 0.0
  %110 = vmatmul.mubr.f32.gmra.mrb[0].mxu0 %v40
  %v111 = vpop.f32.mrb[0].mxu0
  %v112 = vadd.f32 0.0, %v111
  %v113 = vpop.f32.mrb[0].mxu0
  %114 = vmatprep.mubr.f32.mxu0 0.0
  %115 = vmatmul.mubr.f32.gmra.mrb[0].mxu0 %v43
  %v116 = vpop.f32.mrb[0].mxu0
  %v117 = vadd.f32 0.0, %v116
  %v118 = vpop.f32.mrb[0].mxu0
  %119 = vdwg.mxu0
  %v120 = vld [vmem:[%s5] sm:$0x1]
  %v121 = vld [vmem:[%s6] sm:$0x1]
  %v122 = vadd.f32 %v112, %v117
  %v123 = vrot.slane %v122, 4
  %v124 = vadd.f32 %v122, %v123
  %v125 = vrot.slane %v124, 2
  %v126 = vadd.f32 %v124, %v125
  %v127 = vrot.slane %v126, 1
  %v128 = vadd.f32 %v126, %v127
  %v129 = vrcp.pop 16.0
  %v130 = vmul.f32 %v128, %v129
  %v131 = vsub.f32 %v112, %v130
  %v132 = vsub.f32 %v117, %v130
  %v133 = vmul.f32 %v131, %v131
  %v134 = vmul.f32 %v132, %v132
  %v135 = vadd.f32 %v133, %v134
  %v136 = vrot.slane %v135, 4
  %v137 = vadd.f32 %v135, %v136
  %v138 = vrot.slane %v137, 2
  %v139 = vadd.f32 %v137, %v138
  %v140 = vrot.slane %v139, 1
  %v141 = vadd.f32 %v139, %v140
  %v142 = vmul.f32 %v141, %v129
  %v143 = vadd.f32 %v142, 1e-05
  %v144 = vrsqrt.pop %v143
  %v145 = vmul.f32 %v144, %v120
  %v146 = vmul.f32 %v130, %v145
  %v147 = vsub.f32 %v121, %v146
  %v148 = vlaneseq
  %v149 = vshrl.u32 %v148, 7
  %v150 = vsub.s32 0, %v149
  %v151 = vrot.slane %v145, %v150
  %v152 = vmul.f32 %v112, %v151
  %v153 = vmul.f32 %v117, %v151
  %v155 = vlaneseq
  %v156 = vshrl.u32 %v155, 7
  %v157 = vsub.s32 0, %v156
  %v158 = vrot.slane %v147, %v157
  %v160 = vadd.f32 %v152, %v158
  %v161 = vadd.f32 %v153, %v158
  %v162 = vmax.f32 %v160, 0.0
  %v163 = vmax.f32 %v161, 0.0
  %v164 = vld [vmem:[%s2] sm:$0xff]
  %v165 = vld [vmem:[%s2 + $0x8] sm:$0xff]
  %v166 = vld [vmem:[%s2 + $0x10] sm:$0xff]
  %v167 = vld [vmem:[%s2 + $0x18] sm:$0xff]
  %v169 = vsel %vm38, %v162, 0
  %v172 = vsel %vm38, %v163, 0
  %174 = vmatprep.subr.mxu0 0.0
  %175 = vmatpush1.msra.mxu0 %v164
  %176 = vmatprep.subr.mxu0 0.0
  %177 = vmatpush1.msra.mxu0 %v165
  %178 = vmatprep.subr.mxu0 0.0
  %179 = vmatpush1.msra.mxu0 %v166
  %180 = vmatprep.subr.mxu0 0.0
  %181 = vmatpush1.msra.mxu0 %v167
  %182 = vmatprep.subr.mxu0 0.0
  %183 = vmatpush1.msra.mxu0 0.0
  %184 = vmatprep.subr.mxu0 0.0
  %185 = vmatpush1.msra.mxu0 0.0
  %186 = vmatprep.subr.mxu0 0.0
  %187 = vmatpush1.msra.mxu0 0.0
  %188 = vmatprep.subr.mxu0 0.0
  %189 = vmatpush1.msra.mxu0 0.0
  %190 = vmatprep.subr.mxu0 0.0
  %191 = vmatpush1.msra.mxu0 0.0
  %192 = vmatprep.subr.mxu0 0.0
  %193 = vmatpush1.msra.mxu0 0.0
  %194 = vmatprep.subr.mxu0 0.0
  %195 = vmatpush1.msra.mxu0 0.0
  %196 = vmatprep.subr.mxu0 0.0
  %197 = vmatpush1.msra.mxu0 0.0
  %198 = vmatprep.subr.mxu0 0.0
  %199 = vmatpush1.msra.mxu0 0.0
  %200 = vmatprep.subr.mxu0 0.0
  %201 = vmatpush1.msra.mxu0 0.0
  %202 = vmatprep.subr.mxu0 0.0
  %203 = vmatpush1.msra.mxu0 0.0
  %204 = vmatprep.subr.mxu0 0.0
  %205 = vmatpush1.msra.mxu0 0.0
  %206 = vmatprep.subr.mxu0 0.0
  %207 = vmatpush1.msra.mxu0 0.0
  %208 = vmatprep.subr.mxu0 0.0
  %209 = vmatpush1.msra.mxu0 0.0
  %210 = vmatprep.subr.mxu0 0.0
  %211 = vmatpush1.msra.mxu0 0.0
  %212 = vmatprep.subr.mxu0 0.0
  %213 = vmatpush1.msra.mxu0 0.0
  %214 = vmatprep.subr.mxu0 0.0
  %215 = vmatpush1.msra.mxu0 0.0
  %216 = vmatprep.subr.mxu0 0.0
  %217 = vmatpush1.msra.mxu0 0.0
  %218 = vmatprep.subr.mxu0 0.0
  %219 = vmatpush1.msra.mxu0 0.0
  %220 = vmatprep.subr.mxu0 0.0
  %221 = vmatpush1.msra.mxu0 0.0
  %222 = vmatprep.subr.mxu0 0.0
  %223 = vmatpush1.msra.mxu0 0.0
  %224 = vmatprep.subr.mxu0 0.0
  %225 = vmatpush1.msra.mxu0 0.0
  %226 = vmatprep.subr.mxu0 0.0
  %227 = vmatpush1.msra.mxu0 0.0
  %228 = vmatprep.subr.mxu0 0.0
  %229 = vmatpush1.msra.mxu0 0.0
  %230 = vmatprep.subr.mxu0 0.0
  %231 = vmatpush1.msra.mxu0 0.0
  %232 = vmatprep.subr.mxu0 0.0
  %233 = vmatpush1.msra.mxu0 0.0
  %234 = vmatprep.subr.mxu0 0.0
  %235 = vmatpush1.msra.mxu0 0.0
  %236 = vmatprep.subr.mxu0 0.0
  %237 = vmatpush1.msra.mxu0 0.0
  %238 = vmatprep.mubr.f32.mxu0 0.0
  %239 = vmatmul.mubr.f32.gmra.mrb[0].mxu0 %v169
  %v240 = vpop.f32.mrb[0].mxu0
  %v241 = vadd.f32 0.0, %v240
  %v242 = vpop.f32.mrb[0].mxu0
  %243 = vmatprep.mubr.f32.mxu0 0.0
  %244 = vmatmul.mubr.f32.gmra.mrb[0].mxu0 %v172
  %v245 = vpop.f32.mrb[0].mxu0
  %v246 = vadd.f32 0.0, %v245
  %v247 = vpop.f32.mrb[0].mxu0
  %248 = vdwg.mxu0
  %s249 = scalar_lea.vmem %s2, 32
  %v250 = vld [vmem:[%s249] sm:$0xff]
  %v251 = vld [vmem:[%s249 + $0x8] sm:$0xff]
  %v252 = vld [vmem:[%s249 + $0x10] sm:$0xff]
  %v253 = vld [vmem:[%s249 + $0x18] sm:$0xff]
  %254 = vrot.lane.b32.xlu0 %v162, 96
  %v255 = vpop.permute.xlu0 %254
  %256 = vrot.lane.b32.xlu0 %v163, 96
  %v257 = vpop.permute.xlu0 %256
  %v258 = vsel %vm38, %v255, 0
  %v260 = vsel %vm38, %v257, 0
  %262 = vmatprep.subr.mxu0 0.0
  %263 = vmatpush1.msra.mxu0 %v250
  %264 = vmatprep.subr.mxu0 0.0
  %265 = vmatpush1.msra.mxu0 %v251
  %266 = vmatprep.subr.mxu0 0.0
  %267 = vmatpush1.msra.mxu0 %v252
  %268 = vmatprep.subr.mxu0 0.0
  %269 = vmatpush1.msra.mxu0 %v253
  %270 = vmatprep.subr.mxu0 0.0
  %271 = vmatpush1.msra.mxu0 0.0
  %272 = vmatprep.subr.mxu0 0.0
  %273 = vmatpush1.msra.mxu0 0.0
  %274 = vmatprep.subr.mxu0 0.0
  %275 = vmatpush1.msra.mxu0 0.0
  %276 = vmatprep.subr.mxu0 0.0
  %277 = vmatpush1.msra.mxu0 0.0
  %278 = vmatprep.subr.mxu0 0.0
  %279 = vmatpush1.msra.mxu0 0.0
  %280 = vmatprep.subr.mxu0 0.0
  %281 = vmatpush1.msra.mxu0 0.0
  %282 = vmatprep.subr.mxu0 0.0
  %283 = vmatpush1.msra.mxu0 0.0
  %284 = vmatprep.subr.mxu0 0.0
  %285 = vmatpush1.msra.mxu0 0.0
  %286 = vmatprep.subr.mxu0 0.0
  %287 = vmatpush1.msra.mxu0 0.0
  %288 = vmatprep.subr.mxu0 0.0
  %289 = vmatpush1.msra.mxu0 0.0
  %290 = vmatprep.subr.mxu0 0.0
  %291 = vmatpush1.msra.mxu0 0.0
  %292 = vmatprep.subr.mxu0 0.0
  %293 = vmatpush1.msra.mxu0 0.0
  %294 = vmatprep.subr.mxu0 0.0
  %295 = vmatpush1.msra.mxu0 0.0
  %296 = vmatprep.subr.mxu0 0.0
  %297 = vmatpush1.msra.mxu0 0.0
  %298 = vmatprep.subr.mxu0 0.0
  %299 = vmatpush1.msra.mxu0 0.0
  %300 = vmatprep.subr.mxu0 0.0
  %301 = vmatpush1.msra.mxu0 0.0
  %302 = vmatprep.subr.mxu0 0.0
  %303 = vmatpush1.msra.mxu0 0.0
  %304 = vmatprep.subr.mxu0 0.0
  %305 = vmatpush1.msra.mxu0 0.0
  %306 = vmatprep.subr.mxu0 0.0
  %307 = vmatpush1.msra.mxu0 0.0
  %308 = vmatprep.subr.mxu0 0.0
  %309 = vmatpush1.msra.mxu0 0.0
  %310 = vmatprep.subr.mxu0 0.0
  %311 = vmatpush1.msra.mxu0 0.0
  %312 = vmatprep.subr.mxu0 0.0
  %313 = vmatpush1.msra.mxu0 0.0
  %314 = vmatprep.subr.mxu0 0.0
  %315 = vmatpush1.msra.mxu0 0.0
  %316 = vmatprep.subr.mxu0 0.0
  %317 = vmatpush1.msra.mxu0 0.0
  %318 = vmatprep.subr.mxu0 0.0
  %319 = vmatpush1.msra.mxu0 0.0
  %320 = vmatprep.subr.mxu0 0.0
  %321 = vmatpush1.msra.mxu0 0.0
  %322 = vmatprep.subr.mxu0 0.0
  %323 = vmatpush1.msra.mxu0 0.0
  %324 = vmatprep.subr.mxu0 0.0
  %325 = vmatpush1.msra.mxu0 0.0
  %326 = vmatprep.mubr.f32.mxu0 0.0
  %327 = vmatmul.mubr.f32.gmra.mrb[0].mxu0 %v258
  %v328 = vpop.f32.mrb[0].mxu0
  %v329 = vadd.f32 0.0, %v328
  %v330 = vpop.f32.mrb[0].mxu0
  %331 = vmatprep.mubr.f32.mxu0 0.0
  %332 = vmatmul.mubr.f32.gmra.mrb[0].mxu0 %v260
  %v333 = vpop.f32.mrb[0].mxu0
  %v334 = vadd.f32 0.0, %v333
  %v335 = vpop.f32.mrb[0].mxu0
  %336 = vdwg.mxu0
  %s337 = scalar_lea.vmem %s2, 64
  %v338 = vld [vmem:[%s337] sm:$0xff]
  %v339 = vld [vmem:[%s337 + $0x8] sm:$0xff]
  %v340 = vld [vmem:[%s337 + $0x10] sm:$0xff]
  %v341 = vld [vmem:[%s337 + $0x18] sm:$0xff]
  %342 = vrot.lane.b32.xlu0 %v162, 64
  %v343 = vpop.permute.xlu0 %342
  %344 = vrot.lane.b32.xlu0 %v163, 64
  %v345 = vpop.permute.xlu0 %344
  %v346 = vsel %vm38, %v343, 0
  %v348 = vsel %vm38, %v345, 0
  %350 = vmatprep.subr.mxu0 0.0
  %351 = vmatpush1.msra.mxu0 %v338
  %352 = vmatprep.subr.mxu0 0.0
  %353 = vmatpush1.msra.mxu0 %v339
  %354 = vmatprep.subr.mxu0 0.0
  %355 = vmatpush1.msra.mxu0 %v340
  %356 = vmatprep.subr.mxu0 0.0
  %357 = vmatpush1.msra.mxu0 %v341
  %358 = vmatprep.subr.mxu0 0.0
  %359 = vmatpush1.msra.mxu0 0.0
  %360 = vmatprep.subr.mxu0 0.0
  %361 = vmatpush1.msra.mxu0 0.0
  %362 = vmatprep.subr.mxu0 0.0
  %363 = vmatpush1.msra.mxu0 0.0
  %364 = vmatprep.subr.mxu0 0.0
  %365 = vmatpush1.msra.mxu0 0.0
  %366 = vmatprep.subr.mxu0 0.0
  %367 = vmatpush1.msra.mxu0 0.0
  %368 = vmatprep.subr.mxu0 0.0
  %369 = vmatpush1.msra.mxu0 0.0
  %370 = vmatprep.subr.mxu0 0.0
  %371 = vmatpush1.msra.mxu0 0.0
  %372 = vmatprep.subr.mxu0 0.0
  %373 = vmatpush1.msra.mxu0 0.0
  %374 = vmatprep.subr.mxu0 0.0
  %375 = vmatpush1.msra.mxu0 0.0
  %376 = vmatprep.subr.mxu0 0.0
  %377 = vmatpush1.msra.mxu0 0.0
  %378 = vmatprep.subr.mxu0 0.0
  %379 = vmatpush1.msra.mxu0 0.0
  %380 = vmatprep.subr.mxu0 0.0
  %381 = vmatpush1.msra.mxu0 0.0
  %382 = vmatprep.subr.mxu0 0.0
  %383 = vmatpush1.msra.mxu0 0.0
  %384 = vmatprep.subr.mxu0 0.0
  %385 = vmatpush1.msra.mxu0 0.0
  %386 = vmatprep.subr.mxu0 0.0
  %387 = vmatpush1.msra.mxu0 0.0
  %388 = vmatprep.subr.mxu0 0.0
  %389 = vmatpush1.msra.mxu0 0.0
  %390 = vmatprep.subr.mxu0 0.0
  %391 = vmatpush1.msra.mxu0 0.0
  %392 = vmatprep.subr.mxu0 0.0
  %393 = vmatpush1.msra.mxu0 0.0
  %394 = vmatprep.subr.mxu0 0.0
  %395 = vmatpush1.msra.mxu0 0.0
  %396 = vmatprep.subr.mxu0 0.0
  %397 = vmatpush1.msra.mxu0 0.0
  %398 = vmatprep.subr.mxu0 0.0
  %399 = vmatpush1.msra.mxu0 0.0
  %400 = vmatprep.subr.mxu0 0.0
  %401 = vmatpush1.msra.mxu0 0.0
  %402 = vmatprep.subr.mxu0 0.0
  %403 = vmatpush1.msra.mxu0 0.0
  %404 = vmatprep.subr.mxu0 0.0
  %405 = vmatpush1.msra.mxu0 0.0
  %406 = vmatprep.subr.mxu0 0.0
  %407 = vmatpush1.msra.mxu0 0.0
  %408 = vmatprep.subr.mxu0 0.0
  %409 = vmatpush1.msra.mxu0 0.0
  %410 = vmatprep.subr.mxu0 0.0
  %411 = vmatpush1.msra.mxu0 0.0
  %412 = vmatprep.subr.mxu0 0.0
  %413 = vmatpush1.msra.mxu0 0.0
  %414 = vmatprep.mubr.f32.mxu0 0.0
  %415 = vmatmul.mubr.f32.gmra.mrb[0].mxu0 %v346
  %v416 = vpop.f32.mrb[0].mxu0
  %v417 = vadd.f32 0.0, %v416
  %v418 = vpop.f32.mrb[0].mxu0
  %419 = vmatprep.mubr.f32.mxu0 0.0
  %420 = vmatmul.mubr.f32.gmra.mrb[0].mxu0 %v348
  %v421 = vpop.f32.mrb[0].mxu0
  %v422 = vadd.f32 0.0, %v421
  %v423 = vpop.f32.mrb[0].mxu0
  %424 = vdwg.mxu0
  %s425 = scalar_lea.vmem %s2, 96
  %v426 = vld [vmem:[%s425] sm:$0xff]
  %v427 = vld [vmem:[%s425 + $0x8] sm:$0xff]
  %v428 = vld [vmem:[%s425 + $0x10] sm:$0xff]
  %v429 = vld [vmem:[%s425 + $0x18] sm:$0xff]
  %430 = vrot.lane.b32.xlu0 %v162, 32
  %v431 = vpop.permute.xlu0 %430
  %432 = vrot.lane.b32.xlu0 %v163, 32
  %v433 = vpop.permute.xlu0 %432
  %v434 = vsel %vm38, %v431, 0
  %v436 = vsel %vm38, %v433, 0
  %438 = vmatprep.subr.mxu0 0.0
  %439 = vmatpush1.msra.mxu0 %v426
  %440 = vmatprep.subr.mxu0 0.0
  %441 = vmatpush1.msra.mxu0 %v427
  %442 = vmatprep.subr.mxu0 0.0
  %443 = vmatpush1.msra.mxu0 %v428
  %444 = vmatprep.subr.mxu0 0.0
  %445 = vmatpush1.msra.mxu0 %v429
  %446 = vmatprep.subr.mxu0 0.0
  %447 = vmatpush1.msra.mxu0 0.0
  %448 = vmatprep.subr.mxu0 0.0
  %449 = vmatpush1.msra.mxu0 0.0
  %450 = vmatprep.subr.mxu0 0.0
  %451 = vmatpush1.msra.mxu0 0.0
  %452 = vmatprep.subr.mxu0 0.0
  %453 = vmatpush1.msra.mxu0 0.0
  %454 = vmatprep.subr.mxu0 0.0
  %455 = vmatpush1.msra.mxu0 0.0
  %456 = vmatprep.subr.mxu0 0.0
  %457 = vmatpush1.msra.mxu0 0.0
  %458 = vmatprep.subr.mxu0 0.0
  %459 = vmatpush1.msra.mxu0 0.0
  %460 = vmatprep.subr.mxu0 0.0
  %461 = vmatpush1.msra.mxu0 0.0
  %462 = vmatprep.subr.mxu0 0.0
  %463 = vmatpush1.msra.mxu0 0.0
  %464 = vmatprep.subr.mxu0 0.0
  %465 = vmatpush1.msra.mxu0 0.0
  %466 = vmatprep.subr.mxu0 0.0
  %467 = vmatpush1.msra.mxu0 0.0
  %468 = vmatprep.subr.mxu0 0.0
  %469 = vmatpush1.msra.mxu0 0.0
  %470 = vmatprep.subr.mxu0 0.0
  %471 = vmatpush1.msra.mxu0 0.0
  %472 = vmatprep.subr.mxu0 0.0
  %473 = vmatpush1.msra.mxu0 0.0
  %474 = vmatprep.subr.mxu0 0.0
  %475 = vmatpush1.msra.mxu0 0.0
  %476 = vmatprep.subr.mxu0 0.0
  %477 = vmatpush1.msra.mxu0 0.0
  %478 = vmatprep.subr.mxu0 0.0
  %479 = vmatpush1.msra.mxu0 0.0
  %480 = vmatprep.subr.mxu0 0.0
  %481 = vmatpush1.msra.mxu0 0.0
  %482 = vmatprep.subr.mxu0 0.0
  %483 = vmatpush1.msra.mxu0 0.0
  %484 = vmatprep.subr.mxu0 0.0
  %485 = vmatpush1.msra.mxu0 0.0
  %486 = vmatprep.subr.mxu0 0.0
  %487 = vmatpush1.msra.mxu0 0.0
  %488 = vmatprep.subr.mxu0 0.0
  %489 = vmatpush1.msra.mxu0 0.0
  %490 = vmatprep.subr.mxu0 0.0
  %491 = vmatpush1.msra.mxu0 0.0
  %492 = vmatprep.subr.mxu0 0.0
  %493 = vmatpush1.msra.mxu0 0.0
  %494 = vmatprep.subr.mxu0 0.0
  %495 = vmatpush1.msra.mxu0 0.0
  %496 = vmatprep.subr.mxu0 0.0
  %497 = vmatpush1.msra.mxu0 0.0
  %498 = vmatprep.subr.mxu0 0.0
  %499 = vmatpush1.msra.mxu0 0.0
  %500 = vmatprep.subr.mxu0 0.0
  %501 = vmatpush1.msra.mxu0 0.0
  %502 = vmatprep.mubr.f32.mxu0 0.0
  %503 = vmatmul.mubr.f32.gmra.mrb[0].mxu0 %v434
  %v504 = vpop.f32.mrb[0].mxu0
  %v505 = vadd.f32 0.0, %v504
  %v506 = vpop.f32.mrb[0].mxu0
  %507 = vmatprep.mubr.f32.mxu0 0.0
  %508 = vmatmul.mubr.f32.gmra.mrb[0].mxu0 %v436
  %v509 = vpop.f32.mrb[0].mxu0
  %v510 = vadd.f32 0.0, %v509
  %v511 = vpop.f32.mrb[0].mxu0
  %512 = vdwg.mxu0
  %515 = vrot.lane.b32.xlu0 %v329, 32
  %v516 = vpop.permute.xlu0 %515
  %517 = vrot.lane.b32.xlu0 %v334, 32
  %v518 = vpop.permute.xlu0 %517
  %523 = vrot.lane.b32.xlu0 %v417, 64
  %v524 = vpop.permute.xlu0 %523
  %525 = vrot.lane.b32.xlu0 %v422, 64
  %v526 = vpop.permute.xlu0 %525
  %531 = vrot.lane.b32.xlu0 %v505, 96
  %v532 = vpop.permute.xlu0 %531
  %533 = vrot.lane.b32.xlu0 %v510, 96
  %v534 = vpop.permute.xlu0 %533
  %v537 = vsel %vm38, %v241, %v516
  %v538 = vsel %vm38, %v246, %v518
  %vm539 = vcmask 523264
  %v540 = vsel %vm539, %v537, %v524
  %v541 = vsel %vm539, %v538, %v526
  %vm542 = vcmask 785408
  %v543 = vsel %vm542, %v540, %v532
  %v544 = vsel %vm542, %v541, %v534
  %v545 = vld [vmem:[%s7] sm:$0x1]
  %v546 = vld [vmem:[%s8] sm:$0x1]
  %v547 = vadd.f32 %v543, %v544
  %v548 = vrot.slane %v547, 4
  %v549 = vadd.f32 %v547, %v548
  %v550 = vrot.slane %v549, 2
  %v551 = vadd.f32 %v549, %v550
  %v552 = vrot.slane %v551, 1
  %v553 = vadd.f32 %v551, %v552
  %v554 = vmul.f32 %v553, %v129
  %v555 = vsub.f32 %v543, %v554
  %v556 = vsub.f32 %v544, %v554
  %v557 = vmul.f32 %v555, %v555
  %v558 = vmul.f32 %v556, %v556
  %v559 = vadd.f32 %v557, %v558
  %v560 = vrot.slane %v559, 4
  %v561 = vadd.f32 %v559, %v560
  %v562 = vrot.slane %v561, 2
  %v563 = vadd.f32 %v561, %v562
  %v564 = vrot.slane %v563, 1
  %v565 = vadd.f32 %v563, %v564
  %v566 = vmul.f32 %v565, %v129
  %v567 = vadd.f32 %v566, 1e-05
  %v568 = vrsqrt.pop %v567
  %v569 = vmul.f32 %v568, %v545
  %v570 = vmul.f32 %v554, %v569
  %v571 = vsub.f32 %v546, %v570
  %v572 = vlaneseq
  %v573 = vshrl.u32 %v572, 7
  %v574 = vsub.s32 0, %v573
  %v575 = vrot.slane %v569, %v574
  %v576 = vmul.f32 %v543, %v575
  %v577 = vmul.f32 %v544, %v575
  %v579 = vlaneseq
  %v580 = vshrl.u32 %v579, 7
  %v581 = vsub.s32 0, %v580
  %v582 = vrot.slane %v571, %v581
  %v584 = vadd.f32 %v576, %v582
  %v585 = vadd.f32 %v577, %v582
  %v586 = vmax.f32 %v584, 0.0
  %v587 = vmax.f32 %v585, 0.0
  %v588 = vld [vmem:[%s3] sm:$0xff]
  %v589 = vld [vmem:[%s3 + $0x8] sm:$0xff]
  %v590 = vld [vmem:[%s3 + $0x10] sm:$0xff]
  %v591 = vld [vmem:[%s3 + $0x18] sm:$0xff]
  %v593 = vsel %vm38, %v586, 0
  %v596 = vsel %vm38, %v587, 0
  %598 = vmatprep.subr.mxu0 0.0
  %599 = vmatpush1.msra.mxu0 %v588
  %600 = vmatprep.subr.mxu0 0.0
  %601 = vmatpush1.msra.mxu0 %v589
  %602 = vmatprep.subr.mxu0 0.0
  %603 = vmatpush1.msra.mxu0 %v590
  %604 = vmatprep.subr.mxu0 0.0
  %605 = vmatpush1.msra.mxu0 %v591
  %606 = vmatprep.subr.mxu0 0.0
  %607 = vmatpush1.msra.mxu0 0.0
  %608 = vmatprep.subr.mxu0 0.0
  %609 = vmatpush1.msra.mxu0 0.0
  %610 = vmatprep.subr.mxu0 0.0
  %611 = vmatpush1.msra.mxu0 0.0
  %612 = vmatprep.subr.mxu0 0.0
  %613 = vmatpush1.msra.mxu0 0.0
  %614 = vmatprep.subr.mxu0 0.0
  %615 = vmatpush1.msra.mxu0 0.0
  %616 = vmatprep.subr.mxu0 0.0
  %617 = vmatpush1.msra.mxu0 0.0
  %618 = vmatprep.subr.mxu0 0.0
  %619 = vmatpush1.msra.mxu0 0.0
  %620 = vmatprep.subr.mxu0 0.0
  %621 = vmatpush1.msra.mxu0 0.0
  %622 = vmatprep.subr.mxu0 0.0
  %623 = vmatpush1.msra.mxu0 0.0
  %624 = vmatprep.subr.mxu0 0.0
  %625 = vmatpush1.msra.mxu0 0.0
  %626 = vmatprep.subr.mxu0 0.0
  %627 = vmatpush1.msra.mxu0 0.0
  %628 = vmatprep.subr.mxu0 0.0
  %629 = vmatpush1.msra.mxu0 0.0
  %630 = vmatprep.subr.mxu0 0.0
  %631 = vmatpush1.msra.mxu0 0.0
  %632 = vmatprep.subr.mxu0 0.0
  %633 = vmatpush1.msra.mxu0 0.0
  %634 = vmatprep.subr.mxu0 0.0
  %635 = vmatpush1.msra.mxu0 0.0
  %636 = vmatprep.subr.mxu0 0.0
  %637 = vmatpush1.msra.mxu0 0.0
  %638 = vmatprep.subr.mxu0 0.0
  %639 = vmatpush1.msra.mxu0 0.0
  %640 = vmatprep.subr.mxu0 0.0
  %641 = vmatpush1.msra.mxu0 0.0
  %642 = vmatprep.subr.mxu0 0.0
  %643 = vmatpush1.msra.mxu0 0.0
  %644 = vmatprep.subr.mxu0 0.0
  %645 = vmatpush1.msra.mxu0 0.0
  %646 = vmatprep.subr.mxu0 0.0
  %647 = vmatpush1.msra.mxu0 0.0
  %648 = vmatprep.subr.mxu0 0.0
  %649 = vmatpush1.msra.mxu0 0.0
  %650 = vmatprep.subr.mxu0 0.0
  %651 = vmatpush1.msra.mxu0 0.0
  %652 = vmatprep.subr.mxu0 0.0
  %653 = vmatpush1.msra.mxu0 0.0
  %654 = vmatprep.subr.mxu0 0.0
  %655 = vmatpush1.msra.mxu0 0.0
  %656 = vmatprep.subr.mxu0 0.0
  %657 = vmatpush1.msra.mxu0 0.0
  %658 = vmatprep.subr.mxu0 0.0
  %659 = vmatpush1.msra.mxu0 0.0
  %660 = vmatprep.subr.mxu0 0.0
  %661 = vmatpush1.msra.mxu0 0.0
  %662 = vmatprep.mubr.f32.mxu0 0.0
  %663 = vmatmul.mubr.f32.gmra.mrb[0].mxu0 %v593
  %v664 = vpop.f32.mrb[0].mxu0
  %v665 = vadd.f32 0.0, %v664
  %v666 = vpop.f32.mrb[0].mxu0
  %667 = vmatprep.mubr.f32.mxu0 0.0
  %668 = vmatmul.mubr.f32.gmra.mrb[0].mxu0 %v596
  %v669 = vpop.f32.mrb[0].mxu0
  %v670 = vadd.f32 0.0, %v669
  %v671 = vpop.f32.mrb[0].mxu0
  %672 = vdwg.mxu0
  %s673 = scalar_lea.vmem %s3, 32
  %v674 = vld [vmem:[%s673] sm:$0xff]
  %v675 = vld [vmem:[%s673 + $0x8] sm:$0xff]
  %v676 = vld [vmem:[%s673 + $0x10] sm:$0xff]
  %v677 = vld [vmem:[%s673 + $0x18] sm:$0xff]
  %678 = vrot.lane.b32.xlu0 %v586, 96
  %v679 = vpop.permute.xlu0 %678
  %680 = vrot.lane.b32.xlu0 %v587, 96
  %v681 = vpop.permute.xlu0 %680
  %v682 = vsel %vm38, %v679, 0
  %v684 = vsel %vm38, %v681, 0
  %686 = vmatprep.subr.mxu0 0.0
  %687 = vmatpush1.msra.mxu0 %v674
  %688 = vmatprep.subr.mxu0 0.0
  %689 = vmatpush1.msra.mxu0 %v675
  %690 = vmatprep.subr.mxu0 0.0
  %691 = vmatpush1.msra.mxu0 %v676
  %692 = vmatprep.subr.mxu0 0.0
  %693 = vmatpush1.msra.mxu0 %v677
  %694 = vmatprep.subr.mxu0 0.0
  %695 = vmatpush1.msra.mxu0 0.0
  %696 = vmatprep.subr.mxu0 0.0
  %697 = vmatpush1.msra.mxu0 0.0
  %698 = vmatprep.subr.mxu0 0.0
  %699 = vmatpush1.msra.mxu0 0.0
  %700 = vmatprep.subr.mxu0 0.0
  %701 = vmatpush1.msra.mxu0 0.0
  %702 = vmatprep.subr.mxu0 0.0
  %703 = vmatpush1.msra.mxu0 0.0
  %704 = vmatprep.subr.mxu0 0.0
  %705 = vmatpush1.msra.mxu0 0.0
  %706 = vmatprep.subr.mxu0 0.0
  %707 = vmatpush1.msra.mxu0 0.0
  %708 = vmatprep.subr.mxu0 0.0
  %709 = vmatpush1.msra.mxu0 0.0
  %710 = vmatprep.subr.mxu0 0.0
  %711 = vmatpush1.msra.mxu0 0.0
  %712 = vmatprep.subr.mxu0 0.0
  %713 = vmatpush1.msra.mxu0 0.0
  %714 = vmatprep.subr.mxu0 0.0
  %715 = vmatpush1.msra.mxu0 0.0
  %716 = vmatprep.subr.mxu0 0.0
  %717 = vmatpush1.msra.mxu0 0.0
  %718 = vmatprep.subr.mxu0 0.0
  %719 = vmatpush1.msra.mxu0 0.0
  %720 = vmatprep.subr.mxu0 0.0
  %721 = vmatpush1.msra.mxu0 0.0
  %722 = vmatprep.subr.mxu0 0.0
  %723 = vmatpush1.msra.mxu0 0.0
  %724 = vmatprep.subr.mxu0 0.0
  %725 = vmatpush1.msra.mxu0 0.0
  %726 = vmatprep.subr.mxu0 0.0
  %727 = vmatpush1.msra.mxu0 0.0
  %728 = vmatprep.subr.mxu0 0.0
  %729 = vmatpush1.msra.mxu0 0.0
  %730 = vmatprep.subr.mxu0 0.0
  %731 = vmatpush1.msra.mxu0 0.0
  %732 = vmatprep.subr.mxu0 0.0
  %733 = vmatpush1.msra.mxu0 0.0
  %734 = vmatprep.subr.mxu0 0.0
  %735 = vmatpush1.msra.mxu0 0.0
  %736 = vmatprep.subr.mxu0 0.0
  %737 = vmatpush1.msra.mxu0 0.0
  %738 = vmatprep.subr.mxu0 0.0
  %739 = vmatpush1.msra.mxu0 0.0
  %740 = vmatprep.subr.mxu0 0.0
  %741 = vmatpush1.msra.mxu0 0.0
  %742 = vmatprep.subr.mxu0 0.0
  %743 = vmatpush1.msra.mxu0 0.0
  %744 = vmatprep.subr.mxu0 0.0
  %745 = vmatpush1.msra.mxu0 0.0
  %746 = vmatprep.subr.mxu0 0.0
  %747 = vmatpush1.msra.mxu0 0.0
  %748 = vmatprep.subr.mxu0 0.0
  %749 = vmatpush1.msra.mxu0 0.0
  %750 = vmatprep.mubr.f32.mxu0 0.0
  %751 = vmatmul.mubr.f32.gmra.mrb[0].mxu0 %v682
  %v752 = vpop.f32.mrb[0].mxu0
  %v753 = vadd.f32 0.0, %v752
  %v754 = vpop.f32.mrb[0].mxu0
  %755 = vmatprep.mubr.f32.mxu0 0.0
  %756 = vmatmul.mubr.f32.gmra.mrb[0].mxu0 %v684
  %v757 = vpop.f32.mrb[0].mxu0
  %v758 = vadd.f32 0.0, %v757
  %v759 = vpop.f32.mrb[0].mxu0
  %760 = vdwg.mxu0
  %s761 = scalar_lea.vmem %s3, 64
  %v762 = vld [vmem:[%s761] sm:$0xff]
  %v763 = vld [vmem:[%s761 + $0x8] sm:$0xff]
  %v764 = vld [vmem:[%s761 + $0x10] sm:$0xff]
  %v765 = vld [vmem:[%s761 + $0x18] sm:$0xff]
  %766 = vrot.lane.b32.xlu0 %v586, 64
  %v767 = vpop.permute.xlu0 %766
  %768 = vrot.lane.b32.xlu0 %v587, 64
  %v769 = vpop.permute.xlu0 %768
  %v770 = vsel %vm38, %v767, 0
  %v772 = vsel %vm38, %v769, 0
  %774 = vmatprep.subr.mxu0 0.0
  %775 = vmatpush1.msra.mxu0 %v762
  %776 = vmatprep.subr.mxu0 0.0
  %777 = vmatpush1.msra.mxu0 %v763
  %778 = vmatprep.subr.mxu0 0.0
  %779 = vmatpush1.msra.mxu0 %v764
  %780 = vmatprep.subr.mxu0 0.0
  %781 = vmatpush1.msra.mxu0 %v765
  %782 = vmatprep.subr.mxu0 0.0
  %783 = vmatpush1.msra.mxu0 0.0
  %784 = vmatprep.subr.mxu0 0.0
  %785 = vmatpush1.msra.mxu0 0.0
  %786 = vmatprep.subr.mxu0 0.0
  %787 = vmatpush1.msra.mxu0 0.0
  %788 = vmatprep.subr.mxu0 0.0
  %789 = vmatpush1.msra.mxu0 0.0
  %790 = vmatprep.subr.mxu0 0.0
  %791 = vmatpush1.msra.mxu0 0.0
  %792 = vmatprep.subr.mxu0 0.0
  %793 = vmatpush1.msra.mxu0 0.0
  %794 = vmatprep.subr.mxu0 0.0
  %795 = vmatpush1.msra.mxu0 0.0
  %796 = vmatprep.subr.mxu0 0.0
  %797 = vmatpush1.msra.mxu0 0.0
  %798 = vmatprep.subr.mxu0 0.0
  %799 = vmatpush1.msra.mxu0 0.0
  %800 = vmatprep.subr.mxu0 0.0
  %801 = vmatpush1.msra.mxu0 0.0
  %802 = vmatprep.subr.mxu0 0.0
  %803 = vmatpush1.msra.mxu0 0.0
  %804 = vmatprep.subr.mxu0 0.0
  %805 = vmatpush1.msra.mxu0 0.0
  %806 = vmatprep.subr.mxu0 0.0
  %807 = vmatpush1.msra.mxu0 0.0
  %808 = vmatprep.subr.mxu0 0.0
  %809 = vmatpush1.msra.mxu0 0.0
  %810 = vmatprep.subr.mxu0 0.0
  %811 = vmatpush1.msra.mxu0 0.0
  %812 = vmatprep.subr.mxu0 0.0
  %813 = vmatpush1.msra.mxu0 0.0
  %814 = vmatprep.subr.mxu0 0.0
  %815 = vmatpush1.msra.mxu0 0.0
  %816 = vmatprep.subr.mxu0 0.0
  %817 = vmatpush1.msra.mxu0 0.0
  %818 = vmatprep.subr.mxu0 0.0
  %819 = vmatpush1.msra.mxu0 0.0
  %820 = vmatprep.subr.mxu0 0.0
  %821 = vmatpush1.msra.mxu0 0.0
  %822 = vmatprep.subr.mxu0 0.0
  %823 = vmatpush1.msra.mxu0 0.0
  %824 = vmatprep.subr.mxu0 0.0
  %825 = vmatpush1.msra.mxu0 0.0
  %826 = vmatprep.subr.mxu0 0.0
  %827 = vmatpush1.msra.mxu0 0.0
  %828 = vmatprep.subr.mxu0 0.0
  %829 = vmatpush1.msra.mxu0 0.0
  %830 = vmatprep.subr.mxu0 0.0
  %831 = vmatpush1.msra.mxu0 0.0
  %832 = vmatprep.subr.mxu0 0.0
  %833 = vmatpush1.msra.mxu0 0.0
  %834 = vmatprep.subr.mxu0 0.0
  %835 = vmatpush1.msra.mxu0 0.0
  %836 = vmatprep.subr.mxu0 0.0
  %837 = vmatpush1.msra.mxu0 0.0
  %838 = vmatprep.mubr.f32.mxu0 0.0
  %839 = vmatmul.mubr.f32.gmra.mrb[0].mxu0 %v770
  %v840 = vpop.f32.mrb[0].mxu0
  %v841 = vadd.f32 0.0, %v840
  %v842 = vpop.f32.mrb[0].mxu0
  %843 = vmatprep.mubr.f32.mxu0 0.0
  %844 = vmatmul.mubr.f32.gmra.mrb[0].mxu0 %v772
  %v845 = vpop.f32.mrb[0].mxu0
  %v846 = vadd.f32 0.0, %v845
  %v847 = vpop.f32.mrb[0].mxu0
  %848 = vdwg.mxu0
  %s849 = scalar_lea.vmem %s3, 96
  %v850 = vld [vmem:[%s849] sm:$0xff]
  %v851 = vld [vmem:[%s849 + $0x8] sm:$0xff]
  %v852 = vld [vmem:[%s849 + $0x10] sm:$0xff]
  %v853 = vld [vmem:[%s849 + $0x18] sm:$0xff]
  %854 = vrot.lane.b32.xlu0 %v586, 32
  %v855 = vpop.permute.xlu0 %854
  %856 = vrot.lane.b32.xlu0 %v587, 32
  %v857 = vpop.permute.xlu0 %856
  %v858 = vsel %vm38, %v855, 0
  %v860 = vsel %vm38, %v857, 0
  %862 = vmatprep.subr.mxu0 0.0
  %863 = vmatpush1.msra.mxu0 %v850
  %864 = vmatprep.subr.mxu0 0.0
  %865 = vmatpush1.msra.mxu0 %v851
  %866 = vmatprep.subr.mxu0 0.0
  %867 = vmatpush1.msra.mxu0 %v852
  %868 = vmatprep.subr.mxu0 0.0
  %869 = vmatpush1.msra.mxu0 %v853
  %870 = vmatprep.subr.mxu0 0.0
  %871 = vmatpush1.msra.mxu0 0.0
  %872 = vmatprep.subr.mxu0 0.0
  %873 = vmatpush1.msra.mxu0 0.0
  %874 = vmatprep.subr.mxu0 0.0
  %875 = vmatpush1.msra.mxu0 0.0
  %876 = vmatprep.subr.mxu0 0.0
  %877 = vmatpush1.msra.mxu0 0.0
  %878 = vmatprep.subr.mxu0 0.0
  %879 = vmatpush1.msra.mxu0 0.0
  %880 = vmatprep.subr.mxu0 0.0
  %881 = vmatpush1.msra.mxu0 0.0
  %882 = vmatprep.subr.mxu0 0.0
  %883 = vmatpush1.msra.mxu0 0.0
  %884 = vmatprep.subr.mxu0 0.0
  %885 = vmatpush1.msra.mxu0 0.0
  %886 = vmatprep.subr.mxu0 0.0
  %887 = vmatpush1.msra.mxu0 0.0
  %888 = vmatprep.subr.mxu0 0.0
  %889 = vmatpush1.msra.mxu0 0.0
  %890 = vmatprep.subr.mxu0 0.0
  %891 = vmatpush1.msra.mxu0 0.0
  %892 = vmatprep.subr.mxu0 0.0
  %893 = vmatpush1.msra.mxu0 0.0
  %894 = vmatprep.subr.mxu0 0.0
  %895 = vmatpush1.msra.mxu0 0.0
  %896 = vmatprep.subr.mxu0 0.0
  %897 = vmatpush1.msra.mxu0 0.0
  %898 = vmatprep.subr.mxu0 0.0
  %899 = vmatpush1.msra.mxu0 0.0
  %900 = vmatprep.subr.mxu0 0.0
  %901 = vmatpush1.msra.mxu0 0.0
  %902 = vmatprep.subr.mxu0 0.0
  %903 = vmatpush1.msra.mxu0 0.0
  %904 = vmatprep.subr.mxu0 0.0
  %905 = vmatpush1.msra.mxu0 0.0
  %906 = vmatprep.subr.mxu0 0.0
  %907 = vmatpush1.msra.mxu0 0.0
  %908 = vmatprep.subr.mxu0 0.0
  %909 = vmatpush1.msra.mxu0 0.0
  %910 = vmatprep.subr.mxu0 0.0
  %911 = vmatpush1.msra.mxu0 0.0
  %912 = vmatprep.subr.mxu0 0.0
  %913 = vmatpush1.msra.mxu0 0.0
  %914 = vmatprep.subr.mxu0 0.0
  %915 = vmatpush1.msra.mxu0 0.0
  %916 = vmatprep.subr.mxu0 0.0
  %917 = vmatpush1.msra.mxu0 0.0
  %918 = vmatprep.subr.mxu0 0.0
  %919 = vmatpush1.msra.mxu0 0.0
  %920 = vmatprep.subr.mxu0 0.0
  %921 = vmatpush1.msra.mxu0 0.0
  %922 = vmatprep.subr.mxu0 0.0
  %923 = vmatpush1.msra.mxu0 0.0
  %924 = vmatprep.subr.mxu0 0.0
  %925 = vmatpush1.msra.mxu0 0.0
  %926 = vmatprep.mubr.f32.mxu0 0.0
  %927 = vmatmul.mubr.f32.gmra.mrb[0].mxu0 %v858
  %v928 = vpop.f32.mrb[0].mxu0
  %v929 = vadd.f32 0.0, %v928
  %v930 = vpop.f32.mrb[0].mxu0
  %931 = vmatprep.mubr.f32.mxu0 0.0
  %932 = vmatmul.mubr.f32.gmra.mrb[0].mxu0 %v860
  %v933 = vpop.f32.mrb[0].mxu0
  %v934 = vadd.f32 0.0, %v933
  %v935 = vpop.f32.mrb[0].mxu0
  %936 = vdwg.mxu0
  %939 = vrot.lane.b32.xlu0 %v753, 16
  %v940 = vpop.permute.xlu0 %939
  %941 = vrot.lane.b32.xlu0 %v758, 16
  %v942 = vpop.permute.xlu0 %941
  %947 = vrot.lane.b32.xlu0 %v841, 32
  %v948 = vpop.permute.xlu0 %947
  %949 = vrot.lane.b32.xlu0 %v846, 32
  %v950 = vpop.permute.xlu0 %949
  %955 = vrot.lane.b32.xlu0 %v929, 48
  %v956 = vpop.permute.xlu0 %955
  %957 = vrot.lane.b32.xlu0 %v934, 48
  %v958 = vpop.permute.xlu0 %957
  %vm961 = vcmask 130048
  %v962 = vsel %vm961, %v665, %v940
  %v963 = vsel %vm961, %v670, %v942
  %v964 = vsel %vm38, %v962, %v948
  %v965 = vsel %vm38, %v963, %v950
  %vm966 = vcmask 392192
  %v967 = vsel %vm966, %v964, %v956
  %v968 = vsel %vm966, %v965, %v958
  %v969 = vld [vmem:[%s4] sm:$0x1]
  %v971 = vlaneseq
  %v972 = vshrl.u32 %v971, 7
  %v973 = vsub.s32 0, %v972
  %v974 = vrot.slane %v969, %v973
  %v976 = vadd.f32 %v967, %v974
  %v977 = vadd.f32 %v968, %v974
  %978 = vst.msk [vmem:[%s9] sm:$0xff] %vm539, %v976
  %979 = vst.msk [vmem:[%s9 + $0x8] sm:$0xff] %vm539, %v977
  // Predicated region
  $region38: #{group_mlp_forward.1} parent=0 // pred_check
    _
  $region39: #{group_mlp_forward.1} parent=0 // pred_check_branch
    %981 = sbr.rel (0) target = $region41
  $region40: #{group_mlp_forward.1} parent=0 // pred_region
    _
  $region41: #{group_mlp_forward.1} parent=0 // pred_fallthru
    _
  // Predicated region
  $region42: #{group_mlp_forward.1} parent=0 // pred_check
    _
  $region43: #{group_mlp_forward.1} parent=0 // pred_check_branch
    %983 = sbr.rel (0) target = $region45
  $region44: #{group_mlp_forward.1} parent=0 // pred_region
    _
  $region45: #{group_mlp_forward.1} parent=0 // pred_fallthru
    _

</llo_original>
